<compile_context>
chip_gen: v7x
topology: tpu7x:2x2x1
jax: 0.10.0
libtpu: 0.0.40
codegen_flags: <defaults>
</compile_context>

<pallas_src>
import functools

import jax
import jax.numpy as jnp
from jax import lax
from jax.experimental import pallas as pl
from jax.experimental.pallas import tpu as pltpu


def _round_up(x, m):
    return ((x + m - 1) // m) * m


def _cdiv(a, b):
    return -(-a // b)


def _make_dcr_kernel(offsets, cin, tm):
    """Fused deconv+BN+ReLU kernel for a fixed static tap-shift set.

    Per grid step (one lane tile of TM flat x1-grid positions):
      xa_ref : (Cin, TM)        bf16  x1 flat slab, tile t
      xb_ref : (Cin, TM)        bf16  x1 flat slab, tile t+1 (flat halo source)
      w_ref  : (P*Cout, S*Cin)  bf16  per-(phase, shift) weights, BN scale folded
      sh_ref : (P*Cout, 1)      f32   BN shift (+ folded deconv bias)
      o_ref  : (P*Cout, TM)     f32   all 4 sub-pixel phases, lane-dense
      p_ref  : (S*Cin, TM)      bf16  VMEM scratch: in-kernel "im2col"
    """
    def kernel(xa_ref, xb_ref, w_ref, sh_ref, o_ref, p_ref):
        xcat = jnp.concatenate([xa_ref[...], xb_ref[...]], axis=1)   # (Cin, 2*TM)
        # Build the shared shift basis in VMEM — no HBM im2col ever exists.
        for s, off in enumerate(offsets):                            # static unroll
            p_ref[s * cin:(s + 1) * cin, :] = xcat[:, off:off + tm]
        # One MXU matmul produces every (phase, out-channel) row at once.
        d = jnp.dot(w_ref[...], p_ref[...], preferred_element_type=jnp.float32)
        o_ref[...] = jnp.maximum(d + sh_ref[...], 0.0)               # full-width store
    return kernel


def dcr_forward(x1, x2, weight, bias, gamma, beta, run_mean, run_var,
                *, stride=2, padding=2, output_padding=0, eps=1e-5,
                tm=8192, compute_dtype=jnp.bfloat16):
    """Fused DCR forward: ConvTranspose2d(s=2, p=2) -> concat -> BN(eval) -> ReLU."""
    N, Cin, H, W = x1.shape
    Cin_w, Cout, K, K2 = weight.shape
    assert Cin == Cin_w and K == K2
    OH = (H - 1) * stride - 2 * padding + K + output_padding
    OW = (W - 1) * stride - 2 * padding + K + output_padding
    assert x2.shape == (N, Cout, OH, OW)
    f32 = jnp.float32

    # BatchNorm(eval) -> per-channel scale/shift.  Deconv bias and the
    # deconv-half BN scale are folded into the weight matrix / shift vector.
    # TODO(synk): training-mode batch statistics are not computed (eval only).
    scale = gamma.astype(f32) / jnp.sqrt(run_var.astype(f32) + eps)
    shift = beta.astype(f32) - run_mean.astype(f32) * scale
    sc1, sc2 = scale[:Cout], scale[Cout:]
    sh1 = shift[:Cout] + bias.astype(f32) * sc1
    sh2 = shift[Cout:]

    # Sub-pixel (phase) decomposition of the strided transposed conv:
    # output row oh = ph + stride*j only sees taps kh with
    # (ph + padding - kh) % stride == 0, reading x1 row j + dh,
    # dh = (ph + padding - kh) // stride.
    def phase_taps(p):
        t = [(k, (p + padding - k) // stride)
             for k in range(K) if (p + padding - k) % stride == 0]
        assert t, "kernel_size too small for this stride/phase"
        return t

    taps = [phase_taps(p) for p in range(stride)]
    ohp = [_cdiv(OH - p, stride) for p in range(stride)]
    owp = [_cdiv(OW - p, stride) for p in range(stride)]
    phases = [(ph, pw) for ph in range(stride) for pw in range(stride)]
    P = len(phases)

    # One shared halo padding of x1 so every phase/tap read stays in bounds.
    dmin = min(d for p in range(stride) for _, d in taps[p])
    dmax = max(d for p in range(stride) for _, d in taps[p])
    pad_lo = max(0, -dmin)
    pad_hi_h = max(0, max(ohp) - 1 + dmax - (H - 1))
    pad_hi_w = max(0, max(owp) - 1 + dmax - (W - 1))
    Hq, Wq = H + pad_lo + pad_hi_h, W + pad_lo + pad_hi_w
    MQ = N * Hq * Wq                      # flat "g-grid": g = n*Hq*Wq + j*Wq + i

    # Shared tap-shift basis across all phases (flat offsets into padded x1).
    dhs = sorted({d for p in range(stride) for _, d in taps[p]})
    shifts = [(dh, dw) for dh in dhs for dw in dhs]
    S = len(shifts)
    offsets = tuple((dh + pad_lo) * Wq + (dw + pad_lo) for dh, dw in shifts)
    off_max = max(offsets)

    # Lane-dense tile: bound padding waste; the flat halo (off_max) must fit in
    # the single look-ahead tile streamed as the second x1 operand.
    tm = max(128, _round_up(tm, 128))
    ntiles = max(1, _cdiv(MQ, tm))
    tm_eff = _round_up(_cdiv(MQ, ntiles), 128)
    tm_eff = max(tm_eff, _round_up(off_max + 1, 128))
    ntiles = _cdiv(MQ, tm_eff)
    m_main = ntiles * tm_eff

    # x1 -> channel-major flat slab (Cin, MQ) bf16, plus one extra zero tile so
    # the halo stream (block t+1) always exists.
    xq = jnp.pad(x1, ((0, 0), (0, 0), (pad_lo, pad_hi_h), (pad_lo, pad_hi_w)))
    xflat = jnp.transpose(xq, (1, 0, 2, 3)).reshape(Cin, MQ).astype(compute_dtype)
    xflat = jnp.pad(xflat, ((0, 0), (0, m_main + tm_eff - MQ)))

    # Weight matrix: row p*Cout + co, column s*Cin + ci -> w[ci,co,kh,kw]*sc1[co]
    # for the (kh, kw) implied by (phase p, shift s); zero if the tap does not
    # exist for that phase (free: weights are VMEM resident, never streamed).
    wf = weight.astype(f32)
    wrows = []
    for (ph, pw) in phases:
        wcols = []
        for (dh, dw) in shifts:
            kh = ph + padding - stride * dh
            kw = pw + padding - stride * dw
            if 0 <= kh < K and 0 <= kw < K:
                wcols.append(jnp.transpose(wf[:, :, kh, kw]) * sc1[:, None])
            else:
                wcols.append(jnp.zeros((Cout, Cin), f32))
        wrows.append(jnp.concatenate(wcols, axis=1))                 # (Cout, S*Cin)
    wbig = jnp.concatenate(wrows, axis=0).astype(compute_dtype)      # (P*Cout, S*Cin)
    shvec = jnp.tile(sh1, P).reshape(P * Cout, 1)                    # (P*Cout, 1)

    kernel = _make_dcr_kernel(offsets, Cin, tm_eff)
    out_kern = pl.pallas_call(
        kernel,
        out_shape=jax.ShapeDtypeStruct((P * Cout, m_main), f32),
        grid_spec=pltpu.PrefetchScalarGridSpec(
            num_scalar_prefetch=0,
            grid=(ntiles,),
            in_specs=[
                pl.BlockSpec((Cin, tm_eff), lambda t: (0, t)),        # x1 tile t
                pl.BlockSpec((Cin, tm_eff), lambda t: (0, t + 1)),    # x1 tile t+1 (halo)
                pl.BlockSpec((P * Cout, S * Cin), lambda t: (0, 0)),  # folded weights
                pl.BlockSpec((P * Cout, 1), lambda t: (0, 0)),        # folded shift
            ],
            out_specs=pl.BlockSpec((P * Cout, tm_eff), lambda t: (0, t)),
            scratch_shapes=[pltpu.VMEM((S * Cin, tm_eff), compute_dtype)],
        ),
        compiler_params=pltpu.CompilerParams(
            dimension_semantics=("parallel",)),       # shards over 2 TCs on v7x
    )(xflat, xflat, wbig, shvec)

    # Single fused assembly pass: phase re-interleave of the deconv half +
    # skip-half BN/ReLU + channel concat — one read of (kernel out, x2), one
    # write of the final NCHW tensor.
    # TODO(synk): writing interleaved NCHW directly from the kernel would need
    # strided destination DMA; left to this one fused XLA pass instead.
    dec = out_kern[:, :MQ].reshape(P, Cout, N, Hq, Wq)
    if OH % stride == 0 and OW % stride == 0:
        oh2, ow2 = OH // stride, OW // stride
        blk = dec[:, :, :, :oh2, :ow2].reshape(stride, stride, Cout, N, oh2, ow2)
        dec_full = jnp.transpose(blk, (3, 2, 4, 0, 5, 1)).reshape(N, Cout, OH, OW)
    else:
        # Rare odd-size fallback (per-phase strided scatter).
        dec_full = jnp.zeros((N, Cout, OH, OW), f32)
        for pidx, (ph, pw) in enumerate(phases):
            blk = dec[pidx, :, :, :ohp[ph], :owp[pw]]                # (Cout, N, oh, ow)
            dec_full = dec_full.at[:, :, ph::stride, pw::stride].set(
                jnp.transpose(blk, (1, 0, 2, 3)))
    skip = jnp.maximum(
        x2.astype(f32) * sc2.reshape(1, Cout, 1, 1) + sh2.reshape(1, Cout, 1, 1),
        0.0)
    return jnp.concatenate([dec_full, skip], axis=1)


def dcr_reference(x1, x2, weight, bias, gamma, beta, run_mean, run_var,
                  *, stride=2, padding=2, output_padding=0, eps=1e-5):
    """Pure-JAX reference (lax conv with lhs dilation == ConvTranspose2d)."""
    K = weight.shape[2]
    wflip = weight[:, :, ::-1, ::-1]
    rhs = jnp.transpose(wflip, (1, 0, 2, 3))          # (Cout, Cin, K, K)
    pad_lo = K - 1 - padding
    pad_hi = K - 1 - padding + output_padding
    d = lax.conv_general_dilated(
        x1, rhs, window_strides=(1, 1),
        padding=((pad_lo, pad_hi), (pad_lo, pad_hi)),
        lhs_dilation=(stride, stride),
        dimension_numbers=('NCHW', 'OIHW', 'NCHW'),
        precision=lax.Precision.HIGHEST)
    d = d + bias.reshape(1, -1, 1, 1)
    cat = jnp.concatenate([d, x2], axis=1)
    s = gamma / jnp.sqrt(run_var + eps)
    sh = beta - run_mean * s
    return jnp.maximum(cat * s.reshape(1, -1, 1, 1) + sh.reshape(1, -1, 1, 1), 0.0)


def _run_case(seed, N, Cin, Cout, K, H, W, out_pad, tm):
    key = jax.random.PRNGKey(seed)
    k1, k2, k3, k4, k5, k6, k7, k8 = jax.random.split(key, 8)
    OH = (H - 1) * 2 - 2 * 2 + K + out_pad
    OW = (W - 1) * 2 - 2 * 2 + K + out_pad
    x1 = jax.random.normal(k1, (N, Cin, H, W), jnp.float32)
    x2 = jax.random.normal(k2, (N, Cout, OH, OW), jnp.float32)
    weight = 0.1 * jax.random.normal(k3, (Cin, Cout, K, K), jnp.float32)
    bias = 0.1 * jax.random.normal(k4, (Cout,), jnp.float32)
    gamma = 1.0 + 0.1 * jax.random.normal(k5, (2 * Cout,), jnp.float32)
    beta = 0.1 * jax.random.normal(k6, (2 * Cout,), jnp.float32)
    run_mean = 0.1 * jax.random.normal(k7, (2 * Cout,), jnp.float32)
    run_var = jax.random.uniform(k8, (2 * Cout,), jnp.float32, 0.5, 1.5)

    fwd = jax.jit(functools.partial(dcr_forward, output_padding=out_pad, tm=tm))
    out = jax.block_until_ready(
        fwd(x1, x2, weight, bias, gamma, beta, run_mean, run_var))
    assert out.shape == (N, 2 * Cout, OH, OW), out.shape

    # Loose check vs exact f32 module semantics (kernel streams bf16 operands).
    ref = dcr_reference(x1, x2, weight, bias, gamma, beta, run_mean, run_var,
                        output_padding=out_pad)
    assert jnp.allclose(out, ref, atol=5e-2, rtol=5e-2), \
        float(jnp.max(jnp.abs(out - ref)))

    # Tight check vs a reference whose deconv operands are pre-rounded exactly
    # the way the kernel streams them (bf16 x1, bf16 scale-folded weights).
    eps = 1e-5
    sc1 = gamma[:Cout] / jnp.sqrt(run_var[:Cout] + eps)
    x1_m = x1.astype(jnp.bfloat16).astype(jnp.float32)
    w_m = ((weight * sc1[None, :, None, None]).astype(jnp.bfloat16)
           .astype(jnp.float32) / sc1[None, :, None, None])
    ref_m = dcr_reference(x1_m, x2, w_m, bias, gamma, beta, run_mean, run_var,
                          output_padding=out_pad)
    assert jnp.allclose(out, ref_m, atol=1e-3, rtol=1e-3), \
        float(jnp.max(jnp.abs(out - ref_m)))


if __name__ == "__main__":
    # DCR(in=4, out=4, k=5, out_pad=1): x1 (2,4,8,8), x2 (2,4,16,16) -> (2,8,16,16)
    _run_case(seed=0, N=2, Cin=4, Cout=4, K=5, H=8, W=8, out_pad=1, tm=8192)
    # Multi-tile grid + odd output size: exercises the flat-halo stream across
    # tile boundaries and the uneven-phase fallback re-interleave.
    _run_case(seed=1, N=1, Cin=4, Cout=4, K=5, H=10, W=10, out_pad=0, tm=128)
    print("KERNEL_OK")
</pallas_src>

<mosaic_0001>
module attributes {stable_mosaic.version = 11 : i64} {
  func.func @kernel(%arg0: i32, %arg1: memref<4x256xbf16, #tpu.memory_space<vmem>>, %arg2: memref<4x256xbf16, #tpu.memory_space<vmem>>, %arg3: memref<16x36xbf16, #tpu.memory_space<vmem>>, %arg4: memref<16x1xf32, #tpu.memory_space<vmem>>, %arg5: memref<16x256xf32, #tpu.memory_space<vmem>>, %arg6: memref<36x256xbf16, #tpu.memory_space<vmem>>) attributes {dimension_semantics = [#tpu.dimension_semantics<parallel>], iteration_bounds = array<i64: 1>, scalar_prefetch = 0 : i64, scratch_operands = 1 : i64, tpu.core_type = #tpu.core_type<tc>, window_params = [{transform_indices = @transform_0, window_bounds = array<i64: 4, 256>}, {transform_indices = @transform_1, window_bounds = array<i64: 4, 256>}, {pipeline_mode = #tpu.pipeline_mode<synchronous>, transform_indices = @transform_2, window_bounds = array<i64: 16, 36>}, {pipeline_mode = #tpu.pipeline_mode<synchronous>, transform_indices = @transform_3, window_bounds = array<i64: 16, 1>}, {transform_indices = @transform_4, window_bounds = array<i64: 16, 256>}]} {
    %c0 = arith.constant 0 : index
    %c0_0 = arith.constant 0 : index
    %0 = vector.load %arg1[%c0, %c0_0] : memref<4x256xbf16, #tpu.memory_space<vmem>>, vector<4x256xbf16>
    %c0_1 = arith.constant 0 : index
    %c0_2 = arith.constant 0 : index
    %1 = vector.load %arg2[%c0_1, %c0_2] : memref<4x256xbf16, #tpu.memory_space<vmem>>, vector<4x256xbf16>
    %2 = tpu.concatenate %0, %1 in 1 : vector<4x256xbf16>, vector<4x256xbf16> -> vector<4x512xbf16>
    %3 = vector.extract_strided_slice %2 {offsets = [0, 0], sizes = [4, 256], strides = [1, 1]} : vector<4x512xbf16> to vector<4x256xbf16>
    %c0_3 = arith.constant 0 : index
    %c0_4 = arith.constant 0 : index
    %4 = vector.load %arg6[%c0_3, %c0_4] : memref<36x256xbf16, #tpu.memory_space<vmem>>, vector<4x256xbf16>
    tpu.vector_store %arg6[%c0_3, %c0_4], %3 {strides = array<i32>} : memref<36x256xbf16, #tpu.memory_space<vmem>>, vector<4x256xbf16>,
    %5 = vector.extract_strided_slice %2 {offsets = [0, 1], sizes = [4, 256], strides = [1, 1]} : vector<4x512xbf16> to vector<4x256xbf16>
    %c4 = arith.constant 4 : index
    %c0_5 = arith.constant 0 : index
    %6 = vector.load %arg6[%c4, %c0_5] : memref<36x256xbf16, #tpu.memory_space<vmem>>, vector<4x256xbf16>
    tpu.vector_store %arg6[%c4, %c0_5], %5 {strides = array<i32>} : memref<36x256xbf16, #tpu.memory_space<vmem>>, vector<4x256xbf16>,
    %7 = vector.extract_strided_slice %2 {offsets = [0, 2], sizes = [4, 256], strides = [1, 1]} : vector<4x512xbf16> to vector<4x256xbf16>
    %c8 = arith.constant 8 : index
    %c0_6 = arith.constant 0 : index
    %8 = vector.load %arg6[%c8, %c0_6] : memref<36x256xbf16, #tpu.memory_space<vmem>>, vector<4x256xbf16>
    tpu.vector_store %arg6[%c8, %c0_6], %7 {strides = array<i32>} : memref<36x256xbf16, #tpu.memory_space<vmem>>, vector<4x256xbf16>,
    %9 = vector.extract_strided_slice %2 {offsets = [0, 10], sizes = [4, 256], strides = [1, 1]} : vector<4x512xbf16> to vector<4x256xbf16>
    %c12 = arith.constant 12 : index
    %c0_7 = arith.constant 0 : index
    %10 = vector.load %arg6[%c12, %c0_7] : memref<36x256xbf16, #tpu.memory_space<vmem>>, vector<4x256xbf16>
    tpu.vector_store %arg6[%c12, %c0_7], %9 {strides = array<i32>} : memref<36x256xbf16, #tpu.memory_space<vmem>>, vector<4x256xbf16>,
    %11 = vector.extract_strided_slice %2 {offsets = [0, 11], sizes = [4, 256], strides = [1, 1]} : vector<4x512xbf16> to vector<4x256xbf16>
    %c16 = arith.constant 16 : index
    %c0_8 = arith.constant 0 : index
    %12 = vector.load %arg6[%c16, %c0_8] : memref<36x256xbf16, #tpu.memory_space<vmem>>, vector<4x256xbf16>
    tpu.vector_store %arg6[%c16, %c0_8], %11 {strides = array<i32>} : memref<36x256xbf16, #tpu.memory_space<vmem>>, vector<4x256xbf16>,
    %13 = vector.extract_strided_slice %2 {offsets = [0, 12], sizes = [4, 256], strides = [1, 1]} : vector<4x512xbf16> to vector<4x256xbf16>
    %c20 = arith.constant 20 : index
    %c0_9 = arith.constant 0 : index
    %14 = vector.load %arg6[%c20, %c0_9] : memref<36x256xbf16, #tpu.memory_space<vmem>>, vector<4x256xbf16>
    tpu.vector_store %arg6[%c20, %c0_9], %13 {strides = array<i32>} : memref<36x256xbf16, #tpu.memory_space<vmem>>, vector<4x256xbf16>,
    %15 = vector.extract_strided_slice %2 {offsets = [0, 20], sizes = [4, 256], strides = [1, 1]} : vector<4x512xbf16> to vector<4x256xbf16>
    %c24 = arith.constant 24 : index
    %c0_10 = arith.constant 0 : index
    %16 = vector.load %arg6[%c24, %c0_10] : memref<36x256xbf16, #tpu.memory_space<vmem>>, vector<4x256xbf16>
    tpu.vector_store %arg6[%c24, %c0_10], %15 {strides = array<i32>} : memref<36x256xbf16, #tpu.memory_space<vmem>>, vector<4x256xbf16>,
    %17 = vector.extract_strided_slice %2 {offsets = [0, 21], sizes = [4, 256], strides = [1, 1]} : vector<4x512xbf16> to vector<4x256xbf16>
    %c28 = arith.constant 28 : index
    %c0_11 = arith.constant 0 : index
    %18 = vector.load %arg6[%c28, %c0_11] : memref<36x256xbf16, #tpu.memory_space<vmem>>, vector<4x256xbf16>
    tpu.vector_store %arg6[%c28, %c0_11], %17 {strides = array<i32>} : memref<36x256xbf16, #tpu.memory_space<vmem>>, vector<4x256xbf16>,
    %19 = vector.extract_strided_slice %2 {offsets = [0, 22], sizes = [4, 256], strides = [1, 1]} : vector<4x512xbf16> to vector<4x256xbf16>
    %c32 = arith.constant 32 : index
    %c0_12 = arith.constant 0 : index
    %20 = vector.load %arg6[%c32, %c0_12] : memref<36x256xbf16, #tpu.memory_space<vmem>>, vector<4x256xbf16>
    tpu.vector_store %arg6[%c32, %c0_12], %19 {strides = array<i32>} : memref<36x256xbf16, #tpu.memory_space<vmem>>, vector<4x256xbf16>,
    %c0_13 = arith.constant 0 : index
    %c0_14 = arith.constant 0 : index
    %21 = vector.load %arg3[%c0_13, %c0_14] : memref<16x36xbf16, #tpu.memory_space<vmem>>, vector<16x36xbf16>
    %c0_15 = arith.constant 0 : index
    %c0_16 = arith.constant 0 : index
    %22 = vector.load %arg6[%c0_15, %c0_16] : memref<36x256xbf16, #tpu.memory_space<vmem>>, vector<36x256xbf16>
    %cst = arith.constant dense<0.000000e+00> : vector<16x256xf32>
    %23 = tpu.matmul %21, %22, %cst {dimension_numbers = #tpu.dot_dimension_numbers<[1], [0], [0], [1], [0, 0, 1, 1], [], []>} : vector<16x36xbf16>, vector<36x256xbf16>, vector<16x256xf32> -> vector<16x256xf32>
    %c0_17 = arith.constant 0 : index
    %c0_18 = arith.constant 0 : index
    %24 = vector.load %arg4[%c0_17, %c0_18] : memref<16x1xf32, #tpu.memory_space<vmem>>, vector<16x1xf32>
    %25 = vector.broadcast %24 : vector<16x1xf32> to vector<16x256xf32>
    %26 = arith.addf %23, %25 : vector<16x256xf32>
    %cst_19 = arith.constant 0.000000e+00 : f32
    %27 = vector.broadcast %cst_19 : f32 to vector<16x256xf32>
    %28 = arith.maximumf %26, %27 : vector<16x256xf32>
    %c0_20 = arith.constant 0 : index
    %c0_21 = arith.constant 0 : index
    %29 = vector.load %arg5[%c0_20, %c0_21] : memref<16x256xf32, #tpu.memory_space<vmem>>, vector<16x256xf32>
    tpu.vector_store %arg5[%c0_20, %c0_21], %28 {strides = array<i32>} : memref<16x256xf32, #tpu.memory_space<vmem>>, vector<16x256xf32>,
    return
  }
  func.func @transform_0(%arg0: i32) -> (i32, i32) {
    %c0_i32 = arith.constant 0 : i32
    %c0_i32_0 = arith.constant 0 : i32
    return %c0_i32, %arg0 : i32, i32
  }
  func.func @transform_1(%arg0: i32) -> (i32, i32) {
    %c1_i32 = arith.constant 1 : i32
    %0 = arith.addi %arg0, %c1_i32 : i32
    %c0_i32 = arith.constant 0 : i32
    %c0_i32_0 = arith.constant 0 : i32
    return %c0_i32, %0 : i32, i32
  }
  func.func @transform_2(%arg0: i32) -> (i32, i32) {
    %c0_i32 = arith.constant 0 : i32
    %c0_i32_0 = arith.constant 0 : i32
    %c0_i32_1 = arith.constant 0 : i32
    return %c0_i32, %c0_i32_0 : i32, i32
  }
  func.func @transform_3(%arg0: i32) -> (i32, i32) {
    %c0_i32 = arith.constant 0 : i32
    %c0_i32_0 = arith.constant 0 : i32
    %c0_i32_1 = arith.constant 0 : i32
    return %c0_i32, %c0_i32_0 : i32, i32
  }
  func.func @transform_4(%arg0: i32) -> (i32, i32) {
    %c0_i32 = arith.constant 0 : i32
    %c0_i32_0 = arith.constant 0 : i32
    return %c0_i32, %arg0 : i32, i32
  }
}

</mosaic_0001>

<llo_original>
// kernel: tile.8
$region0: #{tile.8}
  #allocation0 [shape = 's32[1]{0}', space=sflag, size = 0x4, scoped, tag = 'scoped memory for tile.8']
  %s0 = inlined_call_operand.vmem [shape: f32[4], index: 0, kind: input, shape index: {}]
  %s1 = inlined_call_operand.vmem [shape: f32[4,4], index: 1, kind: output, shape index: {}]
  // Predicated region
  $region2: #{tile.8} parent=0 // pred_check
    _
  $region3: #{tile.8} parent=0 // pred_check_branch
    %3 = sbr.rel (0) target = $region5
  $region4: #{tile.8} parent=0 // pred_region
    _
  $region5: #{tile.8} parent=0 // pred_fallthru
    _
  %v4 = vld [vmem:[%s0] ss:$0 sm:$0xff]
  %5 = vst [vmem:[%s1] sm:$0xf] %v4

// kernel: tile.0
$region0: #{tile.0}
  %s0 = inlined_call_operand.vmem [shape: f32[4,4], index: 0, kind: input, shape index: {}]
  %s1 = inlined_call_operand.vmem [shape: f32[16,1], index: 1, kind: output, shape index: {}]
  $region1: #{tile.0} parent=0
    #allocation0 [shape = 'u8[4096]{0}', space=vmem, size = 0x1000, scoped, tag = 'scoped mem for input reshape']
    %s3 = sshllo.u32 0, 4
    %v4 = vld [vmem:[%s0] sm:%s3]
    %5 = vst [vmem:[#allocation0] sm:%s3] %v4
    %v6 = vld [vmem:[#allocation0] sm:$0xf]
    %vm7 = vcmask 7168
    %8 = vst.msk [vmem:[%s1] ss:$4 sm:$0xf] %vm7, %v6
    %v9 = vld [vmem:[#allocation0] sm:$0xf]
    %10 = vrot.lane.b32.xlu0 %v9, 127
    %v11 = vpop.permute.xlu0 %10
    %vm12 = vcmask 7168
    %s13 = scalar_lea.vmem %s1, 1
    %14 = vst.msk [vmem:[%s13] ss:$4 sm:$0xf] %vm12, %v11
    %v15 = vld [vmem:[#allocation0] sm:$0xf]
    %16 = vrot.lane.b32.xlu0 %v15, 126
    %v17 = vpop.permute.xlu0 %16
    %vm18 = vcmask 7168
    %s19 = scalar_lea.vmem %s1, 2
    %20 = vst.msk [vmem:[%s19] ss:$4 sm:$0xf] %vm18, %v17
    %v21 = vld [vmem:[#allocation0] sm:$0xf]
    %22 = vrot.lane.b32.xlu0 %v21, 125
    %v23 = vpop.permute.xlu0 %22
    %vm24 = vcmask 7168
    %s25 = scalar_lea.vmem %s1, 3
    %26 = vst.msk [vmem:[%s25] ss:$4 sm:$0xf] %vm24, %v23

// kernel: dcr_forward.1
$region0: #{dcr_forward.1}
  #allocation0 [shape = 'u32[]', space=smem, size = 0x4, offset = 0x4, fixed_abs, tag = 'smem constant byte address 0x4 - core index']
  #allocation1 [shape = 'u32[144,128]{1,0:T(1,128)}', space=vmem, size = 0x12000, scoped, tag = 'internal scratch']
  #allocation2 [shape = 'bf16[36,256]{1,0:T(8,128)(2,1)}', space=vmem, size = 0x5000, scoped, tag = 'scratch operand']
  %s0 = inlined_call_operand.vmem [shape: bf16[4,512], index: 0, kind: input, shape index: {}, may-alias: {0,1}]
  %s1 = inlined_call_operand.vmem [shape: bf16[4,512], index: 1, kind: input, shape index: {}, may-alias: {0,1}]
  %s2 = inlined_call_operand.vmem [shape: bf16[16,36], index: 2, kind: input, shape index: {}]
  %s3 = inlined_call_operand.vmem [shape: f32[16,1], index: 3, kind: input, shape index: {}]
  %s4 = inlined_call_operand.vmem [shape: f32[16,256], index: 4, kind: output, shape index: {}]
  %s5 = sld [smem:[#allocation0]]
  $region26: #{dcr_forward.1} parent=0
    _
  %s7 = ssub.s32 1, %s5
  %s8 = scalar_select 0, %s7, %s5
  // Predicated region
  $region2: #{dcr_forward.1} parent=0 // pred_check
    _
  $region3: #{dcr_forward.1} parent=0 // pred_check_branch
    %10 = sbr.rel (0) target = $region5
  $region4: #{dcr_forward.1} parent=0 // pred_region
    _
  $region5: #{dcr_forward.1} parent=0 // pred_fallthru
    _
  // Predicated region
  $region6: #{dcr_forward.1} parent=0 // pred_check
    _
  $region7: #{dcr_forward.1} parent=0 // pred_check_branch
    %12 = sbr.rel (0) target = $region9
  $region8: #{dcr_forward.1} parent=0 // pred_region
    %s13 = sadd.s32 0, 1
    %s14 = smul.u32 2, %s13
    %p15 = scmp.lt.s32.totalorder %s14, 3
    %s16 = scalar_select %p15, %s14, 3
    %s17 = smul.addr %s16, 2
    %s18 = scalar_lea.vmem %s1, %s17
    %s19 = sadd.s32 0, 1
    %s20 = smul.u32 2, %s19
  $region9: #{dcr_forward.1} parent=0 // pred_fallthru
    _
  // Predicated region
  $region10: #{dcr_forward.1} parent=0 // pred_check
    _
  $region11: #{dcr_forward.1} parent=0 // pred_check_branch
    %22 = sbr.rel (0) target = $region13
  $region12: #{dcr_forward.1} parent=0 // pred_region
    _
  $region13: #{dcr_forward.1} parent=0 // pred_fallthru
    _
  // Predicated region
  $region14: #{dcr_forward.1} parent=0 // pred_check
    _
  $region15: #{dcr_forward.1} parent=0 // pred_check_branch
    %24 = sbr.rel (0) target = $region17
  $region16: #{dcr_forward.1} parent=0 // pred_region
    _
  $region17: #{dcr_forward.1} parent=0 // pred_fallthru
    _
  %s25 = sadd.s32 0, 1
  %s26 = smul.u32 2, %s25
  %p27 = scmp.lt.s32.totalorder %s26, 3
  %s28 = scalar_select %p27, %s26, 3
  %s29 = smul.addr %s28, 2
  %s30 = scalar_lea.vmem %s1, %s29
  %s31 = sadd.s32 0, 1
  %s32 = smul.u32 2, %s31
  %p33 = scmp.lt.s32.totalorder %s32, 3
  %s34 = scalar_select %p33, %s32, 3
  %s35 = smul.addr %s34, 2
  %s36 = scalar_lea.vmem %s1, %s35
  %s37 = sadd.s32 0, 1
  %s38 = smul.u32 2, %s37
  %v40 = vld [vmem:[%s0] sm:$0xf]
  %v41 = vld [vmem:[%s36] sm:$0xf]
  %v44 = vunpack.c.l.s4 1983009808
  %v45 = vunpack.c.0.s8 %v44
  %v46 = vlaneseq
  %v47 = vshrl.u32 %v46, 7
  %v48 = vsub.s32 %v45, %v47
  %v49 = vrot.slane %v40, %v48
  %v50 = vcombine.high %v49, %v49
  %v53 = vunpack.c.l.s4 1983009808
  %v54 = vunpack.c.0.s8 %v53
  %v55 = vlaneseq
  %v56 = vshrl.u32 %v55, 7
  %v57 = vsub.s32 %v54, %v56
  %v58 = vrot.slane %v41, %v57
  %v59 = vunpack.c.l.b16 %v49
  %v60 = vunpack.c.l.b16 %v50
  %v61 = vpack.c.b16 %v60, %v59
  %63 = vst [vmem:[#allocation2] sm:$0x33] %v61
  %v64 = vunpack.c.l.b16 %v58
  %v65 = vpack.c.b16 %v64, %v64
  %v66 = vrot.slane %v61, 6
  %v67 = vrot.slane %v65, 6
  %68 = vrot.lane.b32.xlu0 %v66, 127
  %v69 = vpop.permute.xlu0 %68
  %70 = vrot.lane.b32.xlu0 %v67, 127
  %v71 = vpop.permute.xlu0 %70
  %v72 = vrot.slane %v69, 4
  %v73 = vrot.slane %v71, 4
  %vm74 = vcmask 1043456
  %v75 = vsel %vm74, %v72, %v73
  %vm76 = vcmask 1039360
  %v77 = vsel %vm76, %v69, %v75
  %79 = vst [vmem:[#allocation2] sm:$0xcc] %v77
  %80 = vrot.lane.b32.xlu0 %v61, 126
  %v81 = vpop.permute.xlu0 %80
  %82 = vrot.lane.b32.xlu0 %v65, 126
  %v83 = vpop.permute.xlu0 %82
  %v84 = vrot.slane %v81, 4
  %v85 = vrot.slane %v83, 4
  %v86 = vsel %vm74, %v84, %v85
  %vm87 = vcmask 1031168
  %v88 = vsel %vm87, %v81, %v86
  %90 = vst [vmem:[#allocation2 + $0x8] sm:$0x33] %v88
  %91 = vrot.lane.b32.xlu0 %v66, 118
  %v92 = vpop.permute.xlu0 %91
  %93 = vrot.lane.b32.xlu0 %v67, 118
  %v94 = vpop.permute.xlu0 %93
  %v95 = vrot.slane %v92, 4
  %v96 = vrot.slane %v94, 4
  %v97 = vsel %vm74, %v95, %v96
  %vm98 = vcmask 965632
  %v99 = vsel %vm98, %v92, %v97
  %101 = vst [vmem:[#allocation2 + $0x8] sm:$0xcc] %v99
  %102 = vrot.lane.b32.xlu0 %v61, 117
  %v103 = vpop.permute.xlu0 %102
  %104 = vrot.lane.b32.xlu0 %v65, 117
  %v105 = vpop.permute.xlu0 %104
  %v106 = vrot.slane %v103, 4
  %v107 = vrot.slane %v105, 4
  %v108 = vsel %vm74, %v106, %v107
  %vm109 = vcmask 957440
  %v110 = vsel %vm109, %v103, %v108
  %112 = vst [vmem:[#allocation2 + $0x10] sm:$0x33] %v110
  %113 = vrot.lane.b32.xlu0 %v66, 116
  %v114 = vpop.permute.xlu0 %113
  %115 = vrot.lane.b32.xlu0 %v67, 116
  %v116 = vpop.permute.xlu0 %115
  %v117 = vrot.slane %v114, 4
  %v118 = vrot.slane %v116, 4
  %v119 = vsel %vm74, %v117, %v118
  %vm120 = vcmask 949248
  %v121 = vsel %vm120, %v114, %v119
  %123 = vst [vmem:[#allocation2 + $0x10] sm:$0xcc] %v121
  %124 = vrot.lane.b32.xlu0 %v61, 108
  %v125 = vpop.permute.xlu0 %124
  %126 = vrot.lane.b32.xlu0 %v65, 108
  %v127 = vpop.permute.xlu0 %126
  %v128 = vrot.slane %v125, 4
  %v129 = vrot.slane %v127, 4
  %v130 = vsel %vm74, %v128, %v129
  %vm131 = vcmask 883712
  %v132 = vsel %vm131, %v125, %v130
  %134 = vst [vmem:[#allocation2 + $0x18] sm:$0x33] %v132
  %135 = vrot.lane.b32.xlu0 %v66, 107
  %v136 = vpop.permute.xlu0 %135
  %137 = vrot.lane.b32.xlu0 %v67, 107
  %v138 = vpop.permute.xlu0 %137
  %v139 = vrot.slane %v136, 4
  %v140 = vrot.slane %v138, 4
  %v141 = vsel %vm74, %v139, %v140
  %vm142 = vcmask 875520
  %v143 = vsel %vm142, %v136, %v141
  %145 = vst [vmem:[#allocation2 + $0x18] sm:$0xcc] %v143
  %146 = vrot.lane.b32.xlu0 %v61, 106
  %v147 = vpop.permute.xlu0 %146
  %148 = vrot.lane.b32.xlu0 %v65, 106
  %v149 = vpop.permute.xlu0 %148
  %v150 = vrot.slane %v147, 4
  %v151 = vrot.slane %v149, 4
  %v152 = vsel %vm74, %v150, %v151
  %vm153 = vcmask 867328
  %v154 = vsel %vm153, %v147, %v152
  %156 = vst [vmem:[#allocation2 + $0x20] sm:$0x33] %v154
  %v157 = vld [vmem:[%s2] sm:$0xf]
  %v158 = vld [vmem:[%s2 + $0x4] sm:$0xf]
  %v159 = vld [vmem:[#allocation2] sm:$0xff]
  %v160 = vld [vmem:[#allocation2 + $0x8] sm:$0xff]
  %v161 = vld [vmem:[#allocation2 + $0x10] sm:$0xff]
  %v162 = vld [vmem:[#allocation2 + $0x18] sm:$0xff]
  %v163 = vld [vmem:[#allocation2 + $0x20] sm:$0x33]
  %v164 = vld [vmem:[%s3] sm:$0xff]
  %v165 = vld [vmem:[%s3 + $0x8] sm:$0xff]
  %167 = vset.pattern.permute.xlu0 0
  %168 = vperm.xlu0 %167, %v164
  %v169 = vpop.permute.xlu0 %168
  %172 = vset.pattern.permute.xlu0 0
  %173 = vperm.xlu0 %172, %v165
  %v174 = vpop.permute.xlu0 %173
  %v178 = vunpack.c.l.b16 %v157
  %v179 = vunpack.c.l.b16 %v158
  %v180 = vpack.c.b16 %v179, %v178
  %v186 = vunpack.c.l.b16 %v159
  %v187 = vunpack.c.h.b16 %v159
  %v188 = vunpack.c.l.b16 %v160
  %v189 = vunpack.c.h.b16 %v160
  %v190 = vunpack.c.l.b16 %v161
  %v191 = vunpack.c.h.b16 %v161
  %v192 = vunpack.c.l.b16 %v162
  %v193 = vunpack.c.h.b16 %v162
  %v194 = vunpack.c.l.b16 %v163
  %v195 = vunpack.c.h.b16 %v163
  %v196 = vpack.c.b16 %v188, %v186
  %v197 = vpack.c.b16 %v189, %v187
  %v198 = vpack.c.b16 %v192, %v190
  %v199 = vpack.c.b16 %v193, %v191
  %v200 = vpack.c.b16 %v194, %v194
  %v201 = vpack.c.b16 %v195, %v195
  %vm206 = vcmask 293888
  %v208 = vsel %vm206, %v180, 0
  %vm210 = vcmask 1041408
  %v212 = vsel %vm210, %v200, 0
  %v215 = vsel %vm210, %v201, 0
  %217 = vmatprep.subr.bf16.mxu0 %v197
  %218 = vmatpush1.bf16.msra.mxu0 %v196
  %219 = vmatprep.subr.bf16.mxu0 %v199
  %220 = vmatpush1.bf16.msra.mxu0 %v198
  %221 = vmatprep.subr.bf16.mxu0 %v215
  %222 = vmatpush1.bf16.msra.mxu0 %v212
  %223 = vmatprep.subr.bf16.mxu0 0
  %224 = vmatpush1.bf16.msra.mxu0 0
  %225 = vmatprep.subr.bf16.mxu0 0
  %226 = vmatpush1.bf16.msra.mxu0 0
  %227 = vmatprep.subr.bf16.mxu0 0
  %228 = vmatpush1.bf16.msra.mxu0 0
  %229 = vmatprep.subr.bf16.mxu0 0
  %230 = vmatpush1.bf16.msra.mxu0 0
  %231 = vmatprep.subr.bf16.mxu0 0
  %232 = vmatpush1.bf16.msra.mxu0 0
  %233 = vmatprep.subr.bf16.mxu0 0
  %234 = vmatpush1.bf16.msra.mxu0 0
  %235 = vmatprep.subr.bf16.mxu0 0
  %236 = vmatpush1.bf16.msra.mxu0 0
  %237 = vmatprep.subr.bf16.mxu0 0
  %238 = vmatpush1.bf16.msra.mxu0 0
  %239 = vmatprep.subr.bf16.mxu0 0
  %240 = vmatpush1.bf16.msra.mxu0 0
  %241 = vmatprep.subr.bf16.mxu0 0
  %242 = vmatpush1.bf16.msra.mxu0 0
  %243 = vmatprep.subr.bf16.mxu0 0
  %244 = vmatpush1.bf16.msra.mxu0 0
  %245 = vmatprep.subr.bf16.mxu0 0
  %246 = vmatpush1.bf16.msra.mxu0 0
  %247 = vmatprep.subr.bf16.mxu0 0
  %248 = vmatpush1.bf16.msra.mxu0 0
  %249 = vmatprep.mubr.bf16.mxu0 0
  %250 = vmatmul.mubr.bf16.gmra.mrb[0].mxu0 %v208
  %v251 = vpop.f32.mrb[0].mxu0
  %v252 = vadd.f32 %v169, %v251
  %v253 = vpop.f32.mrb[0].mxu0
  %v254 = vadd.f32 %v169, %v253
  %v255 = vpop.f32.mrb[0].mxu0
  %v256 = vadd.f32 %v174, %v255
  %v257 = vpop.f32.mrb[0].mxu0
  %v258 = vadd.f32 %v174, %v257
  %259 = vdwg.mxu0
  %v260 = vmax.f32 %v252, 0.0
  %v261 = vmax.f32 %v254, 0.0
  %v262 = vmax.f32 %v256, 0.0
  %v263 = vmax.f32 %v258, 0.0
  %264 = vst [vmem:[%s4] sm:$0xff] %v260
  %265 = vst [vmem:[%s4 + $0x8] sm:$0xff] %v261
  %266 = vst [vmem:[%s4 + $0x10] sm:$0xff] %v262
  %267 = vst [vmem:[%s4 + $0x18] sm:$0xff] %v263
  // Predicated region
  $region18: #{dcr_forward.1} parent=0 // pred_check
    _
  $region19: #{dcr_forward.1} parent=0 // pred_check_branch
    %269 = sbr.rel (0) target = $region21
  $region20: #{dcr_forward.1} parent=0 // pred_region
    _
  $region21: #{dcr_forward.1} parent=0 // pred_fallthru
    _
  // Predicated region
  $region22: #{dcr_forward.1} parent=0 // pred_check
    _
  $region23: #{dcr_forward.1} parent=0 // pred_check_branch
    %271 = sbr.rel (0) target = $region25
  $region24: #{dcr_forward.1} parent=0 // pred_region
    _
  $region25: #{dcr_forward.1} parent=0 // pred_fallthru
    _

</llo_original>
